<compile_context>
chip_gen: v7x
topology: tpu7x:2x2x1
jax: 0.10.0
libtpu: 0.0.40
codegen_flags: <defaults>
</compile_context>

<pallas_src>
import functools

import jax
import jax.numpy as jnp
from jax import lax
from jax.experimental import pallas as pl
from jax.experimental.pallas import tpu as pltpu


def _resblock_kernel(x_ref, w1_ref, b1_ref, w2_ref, b2_ref, o_ref):
    # h = tanh(x @ W1^T + b1); y = h @ W2^T + b2; out = tanh(y + x)
    x = x_ref[...]
    x_f32 = x.astype(jnp.float32)

    # Feed the MXU in the weight dtype (bf16 when bf16 weights are supplied);
    # accumulate in f32 via preferred_element_type.
    mxu_dtype = w1_ref.dtype
    x_mxu = x if x.dtype == mxu_dtype else x.astype(mxu_dtype)

    # Contract x's dim 1 against the weight's dim 1 (PyTorch (out, in) layout)
    # -> no host-side transpose needed; the MXU handles it natively.
    dnums = (((1,), (1,)), ((), ()))

    h = lax.dot_general(x_mxu, w1_ref[...], dnums,
                        preferred_element_type=jnp.float32)
    h = jnp.tanh(h + b1_ref[...].astype(jnp.float32))      # (1, D) broadcasts over rows

    h_mxu = h if h.dtype == mxu_dtype else h.astype(mxu_dtype)
    y = lax.dot_general(h_mxu, w2_ref[...], dnums,
                        preferred_element_type=jnp.float32)
    y = y + b2_ref[...].astype(jnp.float32)

    o_ref[...] = jnp.tanh(y + x_f32).astype(o_ref.dtype)


def _default_block_b(B):
    if B <= 512:
        return B
    for b in (512, 256, 128, 64, 32, 16, 8):
        if B % b == 0:
            return b
    return B


@functools.partial(jax.jit, static_argnames=("block_b",))
def residual_block(x, w1, b1, w2, b2, *, block_b=None):
    """x: (B, D). w1, w2: (D, D) PyTorch (out, in) layout. b1, b2: (D,).

    For best MXU throughput on v6e/v7x, pass w1/w2 (and x) as bf16; the kernel
    keeps the accumulator, bias add, tanh and residual add in f32.
    """
    B, D = x.shape
    if block_b is None:
        block_b = _default_block_b(B)
    assert B % block_b == 0, (B, block_b)

    b1_2d = b1.reshape(1, D)
    b2_2d = b2.reshape(1, D)

    # Explicit VMEM budget: single-buffered weights + biases, double-buffered
    # x / out tiles, plus slack for compiler-internal scratch.
    itemsize = lambda a: jnp.dtype(a.dtype).itemsize
    need = (2 * D * D * itemsize(w1)                       # W1, W2 (Buffered(1))
            + 2 * D * itemsize(b1)                         # b1, b2
            + 2 * 2 * block_b * D * itemsize(x))           # x + out, double-buffered
    vmem_limit = int(min(max(need + (4 << 20), 32 << 20), 96 << 20))

    weight_spec = lambda: pl.BlockSpec((D, D), lambda i: (0, 0),
                                       pipeline_mode=pl.Buffered(1))
    bias_spec = lambda: pl.BlockSpec((1, D), lambda i: (0, 0),
                                     pipeline_mode=pl.Buffered(1))

    grid = (B // block_b,)
    return pl.pallas_call(
        _resblock_kernel,
        out_shape=jax.ShapeDtypeStruct((B, D), x.dtype),
        grid_spec=pltpu.PrefetchScalarGridSpec(
            num_scalar_prefetch=0,
            grid=grid,
            in_specs=[
                pl.BlockSpec((block_b, D), lambda i: (i, 0)),   # x tile (double-buffered)
                weight_spec(),                                  # W1 (resident, 1 buffer)
                bias_spec(),                                    # b1
                weight_spec(),                                  # W2 (resident, 1 buffer)
                bias_spec(),                                    # b2
            ],
            out_specs=pl.BlockSpec((block_b, D), lambda i: (i, 0)),
        ),
        compiler_params=pltpu.CompilerParams(
            dimension_semantics=("parallel",),
            vmem_limit_bytes=vmem_limit,
        ),
    )(x, w1, b1_2d, w2, b2_2d)


def residual_block_ref(x, w1, b1, w2, b2):
    """Plain-JAX f32 reference matching the PyTorch forward exactly."""
    x = x.astype(jnp.float32)
    w1 = w1.astype(jnp.float32)
    w2 = w2.astype(jnp.float32)
    b1 = b1.astype(jnp.float32)
    b2 = b2.astype(jnp.float32)
    h = jnp.tanh(x @ w1.T + b1)
    y = h @ w2.T + b2
    return jnp.tanh(y + x)


if __name__ == "__main__":
    key = jax.random.PRNGKey(0)

    # ---- Primary test: small f32 problem, batch tiled so the grid has 2 steps.
    B, D = 16, 32
    kx, kw1, kb1, kw2, kb2 = jax.random.split(key, 5)
    bound = 1.0 / (D ** 0.5)
    x = jax.random.normal(kx, (B, D), dtype=jnp.float32)
    w1 = jax.random.uniform(kw1, (D, D), jnp.float32, -bound, bound)
    b1 = jax.random.uniform(kb1, (D,), jnp.float32, -bound, bound)
    w2 = jax.random.uniform(kw2, (D, D), jnp.float32, -bound, bound)
    b2 = jax.random.uniform(kb2, (D,), jnp.float32, -bound, bound)

    out = jax.block_until_ready(residual_block(x, w1, b1, w2, b2, block_b=8))
    ref = residual_block_ref(x, w1, b1, w2, b2)
    assert out.shape == (B, D) and out.dtype == x.dtype
    assert jnp.allclose(out, ref, atol=1e-5, rtol=1e-5), (
        float(jnp.max(jnp.abs(out - ref)))
    )

    # ---- Secondary test: bf16 MXU operands (the recommended v6e/v7x config),
    # lane-dense D=128, f32 accumulation inside the kernel.
    B2, D2 = 64, 128
    k2 = jax.random.split(jax.random.PRNGKey(1), 5)
    bound2 = 1.0 / (D2 ** 0.5)
    x2 = jax.random.normal(k2[0], (B2, D2), dtype=jnp.float32).astype(jnp.bfloat16)
    w1b = jax.random.uniform(k2[1], (D2, D2), jnp.float32, -bound2, bound2).astype(jnp.bfloat16)
    b1b = jax.random.uniform(k2[2], (D2,), jnp.float32, -bound2, bound2)
    w2b = jax.random.uniform(k2[3], (D2, D2), jnp.float32, -bound2, bound2).astype(jnp.bfloat16)
    b2b = jax.random.uniform(k2[4], (D2,), jnp.float32, -bound2, bound2)

    out2 = jax.block_until_ready(residual_block(x2, w1b, b1b, w2b, b2b, block_b=32))
    ref2 = residual_block_ref(x2, w1b, b1b, w2b, b2b)
    assert out2.shape == (B2, D2) and out2.dtype == x2.dtype
    assert jnp.allclose(out2.astype(jnp.float32), ref2, atol=3e-2, rtol=3e-2), (
        float(jnp.max(jnp.abs(out2.astype(jnp.float32) - ref2)))
    )

    print("KERNEL_OK")
</pallas_src>

<mosaic_0001>
module attributes {stable_mosaic.version = 11 : i64} {
  func.func @_resblock_kernel(%arg0: i32, %arg1: memref<8x32xf32, #tpu.memory_space<vmem>>, %arg2: memref<32x32xf32, #tpu.memory_space<vmem>>, %arg3: memref<1x32xf32, #tpu.memory_space<vmem>>, %arg4: memref<32x32xf32, #tpu.memory_space<vmem>>, %arg5: memref<1x32xf32, #tpu.memory_space<vmem>>, %arg6: memref<8x32xf32, #tpu.memory_space<vmem>>) attributes {dimension_semantics = [#tpu.dimension_semantics<parallel>], iteration_bounds = array<i64: 2>, scalar_prefetch = 0 : i64, scratch_operands = 0 : i64, tpu.core_type = #tpu.core_type<tc>, window_params = [{transform_indices = @transform_0, window_bounds = array<i64: 8, 32>}, {pipeline_mode = #tpu.pipeline_mode<synchronous>, transform_indices = @transform_1, window_bounds = array<i64: 32, 32>}, {pipeline_mode = #tpu.pipeline_mode<synchronous>, transform_indices = @transform_2, window_bounds = array<i64: 1, 32>}, {pipeline_mode = #tpu.pipeline_mode<synchronous>, transform_indices = @transform_3, window_bounds = array<i64: 32, 32>}, {pipeline_mode = #tpu.pipeline_mode<synchronous>, transform_indices = @transform_4, window_bounds = array<i64: 1, 32>}, {transform_indices = @transform_5, window_bounds = array<i64: 8, 32>}]} {
    %c0 = arith.constant 0 : index
    %c0_0 = arith.constant 0 : index
    %0 = vector.load %arg1[%c0, %c0_0] : memref<8x32xf32, #tpu.memory_space<vmem>>, vector<8x32xf32>
    %c0_1 = arith.constant 0 : index
    %c0_2 = arith.constant 0 : index
    %1 = vector.load %arg2[%c0_1, %c0_2] : memref<32x32xf32, #tpu.memory_space<vmem>>, vector<32x32xf32>
    %cst = arith.constant dense<0.000000e+00> : vector<8x32xf32>
    %2 = tpu.matmul %0, %1, %cst {dimension_numbers = #tpu.dot_dimension_numbers<[1], [1], [0], [0], [0, 0, 1, 0], [], []>} : vector<8x32xf32>, vector<32x32xf32>, vector<8x32xf32> -> vector<8x32xf32>
    %c0_3 = arith.constant 0 : index
    %c0_4 = arith.constant 0 : index
    %3 = vector.load %arg3[%c0_3, %c0_4] : memref<1x32xf32, #tpu.memory_space<vmem>>, vector<1x32xf32>
    %4 = vector.broadcast %3 : vector<1x32xf32> to vector<8x32xf32>
    %5 = arith.addf %2, %4 : vector<8x32xf32>
    %6 = math.tanh %5 : vector<8x32xf32>
    %c0_5 = arith.constant 0 : index
    %c0_6 = arith.constant 0 : index
    %7 = vector.load %arg4[%c0_5, %c0_6] : memref<32x32xf32, #tpu.memory_space<vmem>>, vector<32x32xf32>
    %cst_7 = arith.constant dense<0.000000e+00> : vector<8x32xf32>
    %8 = tpu.matmul %6, %7, %cst_7 {dimension_numbers = #tpu.dot_dimension_numbers<[1], [1], [0], [0], [0, 0, 1, 0], [], []>} : vector<8x32xf32>, vector<32x32xf32>, vector<8x32xf32> -> vector<8x32xf32>
    %c0_8 = arith.constant 0 : index
    %c0_9 = arith.constant 0 : index
    %9 = vector.load %arg5[%c0_8, %c0_9] : memref<1x32xf32, #tpu.memory_space<vmem>>, vector<1x32xf32>
    %10 = vector.broadcast %9 : vector<1x32xf32> to vector<8x32xf32>
    %11 = arith.addf %8, %10 : vector<8x32xf32>
    %12 = arith.addf %11, %0 : vector<8x32xf32>
    %13 = math.tanh %12 : vector<8x32xf32>
    %c0_10 = arith.constant 0 : index
    %c0_11 = arith.constant 0 : index
    %14 = vector.load %arg6[%c0_10, %c0_11] : memref<8x32xf32, #tpu.memory_space<vmem>>, vector<8x32xf32>
    tpu.vector_store %arg6[%c0_10, %c0_11], %13 {strides = array<i32>} : memref<8x32xf32, #tpu.memory_space<vmem>>, vector<8x32xf32>,
    return
  }
  func.func @transform_0(%arg0: i32) -> (i32, i32) {
    %c0_i32 = arith.constant 0 : i32
    %c0_i32_0 = arith.constant 0 : i32
    return %arg0, %c0_i32 : i32, i32
  }
  func.func @transform_1(%arg0: i32) -> (i32, i32) {
    %c0_i32 = arith.constant 0 : i32
    %c0_i32_0 = arith.constant 0 : i32
    %c0_i32_1 = arith.constant 0 : i32
    return %c0_i32, %c0_i32_0 : i32, i32
  }
  func.func @transform_2(%arg0: i32) -> (i32, i32) {
    %c0_i32 = arith.constant 0 : i32
    %c0_i32_0 = arith.constant 0 : i32
    %c0_i32_1 = arith.constant 0 : i32
    return %c0_i32, %c0_i32_0 : i32, i32
  }
  func.func @transform_3(%arg0: i32) -> (i32, i32) {
    %c0_i32 = arith.constant 0 : i32
    %c0_i32_0 = arith.constant 0 : i32
    %c0_i32_1 = arith.constant 0 : i32
    return %c0_i32, %c0_i32_0 : i32, i32
  }
  func.func @transform_4(%arg0: i32) -> (i32, i32) {
    %c0_i32 = arith.constant 0 : i32
    %c0_i32_0 = arith.constant 0 : i32
    %c0_i32_1 = arith.constant 0 : i32
    return %c0_i32, %c0_i32_0 : i32, i32
  }
  func.func @transform_5(%arg0: i32) -> (i32, i32) {
    %c0_i32 = arith.constant 0 : i32
    %c0_i32_0 = arith.constant 0 : i32
    return %arg0, %c0_i32 : i32, i32
  }
}

</mosaic_0001>

<llo_original>
// kernel: residual_block.1
$region0: #{residual_block.1}
  #allocation0 [shape = 'u32[]', space=smem, size = 0x4, offset = 0x4, fixed_abs, tag = 'smem constant byte address 0x4 - core index']
  #allocation1 [shape = 'u32[144,128]{1,0:T(1,128)}', space=vmem, size = 0x12000, scoped, tag = 'internal scratch']
  %s0 = inlined_call_operand.hbm [shape: f32[16,32], index: 0, kind: input, shape index: {}]
  %s1 = inlined_call_operand.hbm [shape: f32[32,32], index: 1, kind: input, shape index: {}]
  %s2 = inlined_call_operand.vmem [shape: f32[1,32], index: 2, kind: input, shape index: {}]
  %s3 = inlined_call_operand.hbm [shape: f32[32,32], index: 3, kind: input, shape index: {}]
  %s4 = inlined_call_operand.vmem [shape: f32[1,32], index: 4, kind: input, shape index: {}]
  %s5 = inlined_call_operand.hbm [shape: f32[16,32], index: 5, kind: output, shape index: {}]
  %s6 = sld [smem:[#allocation0]]
  $region65: #{residual_block.1} parent=0
    _
  %s8 = ssub.s32 1, %s6
  %s9 = scalar_select 0, %s8, %s6
  $region1: #{residual_block.1} parent=0
    #allocation2 [shape = 'u8[8192]{0}', space=vmem, size = 0x2000, scoped, tag = 'input window, operand 0']
    #allocation3 [shape = 's32[2]{0}', space=sflag, size = 0x8, scoped, tag = 'scoped memory for residual_block.1']
    #allocation4 [shape = 's32[2]{0}', space=sflag, size = 0x8, scoped, tag = 'scoped memory for residual_block.1']
    #allocation5 [shape = 'u8[16384]{0}', space=vmem, size = 0x4000, scoped, tag = 'input window, operand 1, single buffered']
    #allocation6 [shape = 's32[1]{0}', space=sflag, size = 0x4, scoped, tag = 'scoped memory for residual_block.1']
    #allocation7 [shape = 'u8[16384]{0}', space=vmem, size = 0x4000, scoped, tag = 'input window, operand 3, single buffered']
    #allocation8 [shape = 'u8[8192]{0}', space=vmem, size = 0x2000, scoped, tag = 'output window, operand 0']
    %10 = vsyncpa [#allocation3], 0
    %s11 = scalar_lea.sflag [#allocation3], 1
    %12 = vsyncpa %s11, 0
    %13 = vsyncpa [#allocation6], 0
    %14 = vsyncpa [#allocation4], 0
    %s15 = scalar_lea.sflag [#allocation4], 1
    %16 = vsyncpa %s15, 0
    loop: start=0, step=1, limit=4
    $region2: #{residual_block.1} parent=1 // loop_pre_header
      _
    $region3: #{residual_block.1} parent=1 // loop_header
      %s18 = sphi 0, %s22
      %p19 = scmp.ge.s32.totalorder %s18, 4
      %s28 = sphi 0, %s30
      %s31 = sphi 0, %s28
      %s32 = sphi 0, %s31
      %s48 = sphi 0, %s32
      %s52 = sphi 0, %s52
      %s54 = sphi 0, %s52
      %s55 = sphi 0, %s54
      %s69 = sphi 0, %s55
      %s73 = sphi 0, %s73
      %s75 = sphi 0, %s73
      %s76 = sphi 0, %s75
      %s90 = sphi 0, %s76
      %s94 = sphi 0, %s94
      %s96 = sphi 0, %s94
      %s97 = sphi 0, %s96
      %s111 = sphi 0, %s97
      %s115 = sphi 0, %s115
      %s117 = sphi 0, %s115
      %s118 = sphi 0, %s117
      %s132 = sphi 0, %s118
      %s138 = sphi 0, %s140
      %s141 = sphi 0, %s138
      %s142 = sphi 0, %s141
      %s158 = sphi 0, %s142
    $region4: #{residual_block.1} parent=1 // loop_header_branch
      %21 = sbr.rel (%p19) target = $region8
    $region5: #{residual_block.1} parent=1 // loop_body
      %s23 = ssub.s32 %s18, 1
      %s24 = ssub.s32 %s18, 2
      %s25 = sadd.s32 %s18, 1
      %s26 = ssub.s32 %s18, %s25
      %p27 = scmp.eq.s32.totalorder %s26, 0
      %s29 = sadd.s32 %s28, 1
      %s30 = scalar_select %p27, %s28, %s29
      %p33 = pneg %p27
      %p34 = scmp.eq.s32.totalorder %s18, 1
      %p35 = por %p33, %p34
      %p36 = scmp.ne.s32.totalorder %s28, %s31
      %p37 = scmp.eq.s32.totalorder %s18, 0
      %p38 = por %p36, %p37
      %p39 = scmp.ne.s32.totalorder %s28, %s31
      %p40 = scmp.eq.s32.totalorder %s23, 1
      %p41 = por %p39, %p40
      %p42 = scmp.ne.s32.totalorder %s31, %s32
      %p43 = scmp.eq.s32.totalorder %s23, 0
      %p44 = por %p42, %p43
      %p45 = scmp.ne.s32.totalorder %s31, %s32
      %p46 = scmp.eq.s32.totalorder %s24, 1
      %p47 = por %p45, %p46
      %p49 = scmp.ne.s32.totalorder %s32, %s48
      %p50 = scmp.eq.s32.totalorder %s24, 0
      %p51 = por %p49, %p50
      %s53 = sadd.s32 %s52, 1
      %p56 = scmp.eq.s32.totalorder %s18, 1
      %p57 = scmp.ne.s32.totalorder %s52, %s54
      %p58 = scmp.eq.s32.totalorder %s18, 0
      %p59 = por %p57, %p58
      %p60 = scmp.ne.s32.totalorder %s52, %s54
      %p61 = scmp.eq.s32.totalorder %s23, 1
      %p62 = por %p60, %p61
      %p63 = scmp.ne.s32.totalorder %s54, %s55
      %p64 = scmp.eq.s32.totalorder %s23, 0
      %p65 = por %p63, %p64
      %p66 = scmp.ne.s32.totalorder %s54, %s55
      %p67 = scmp.eq.s32.totalorder %s24, 1
      %p68 = por %p66, %p67
      %p70 = scmp.ne.s32.totalorder %s55, %s69
      %p71 = scmp.eq.s32.totalorder %s24, 0
      %p72 = por %p70, %p71
      %s74 = sadd.s32 %s73, 1
      %p77 = scmp.eq.s32.totalorder %s18, 1
      %p78 = scmp.ne.s32.totalorder %s73, %s75
      %p79 = scmp.eq.s32.totalorder %s18, 0
      %p80 = por %p78, %p79
      %p81 = scmp.ne.s32.totalorder %s73, %s75
      %p82 = scmp.eq.s32.totalorder %s23, 1
      %p83 = por %p81, %p82
      %p84 = scmp.ne.s32.totalorder %s75, %s76
      %p85 = scmp.eq.s32.totalorder %s23, 0
      %p86 = por %p84, %p85
      %p87 = scmp.ne.s32.totalorder %s75, %s76
      %p88 = scmp.eq.s32.totalorder %s24, 1
      %p89 = por %p87, %p88
      %p91 = scmp.ne.s32.totalorder %s76, %s90
      %p92 = scmp.eq.s32.totalorder %s24, 0
      %p93 = por %p91, %p92
      %s95 = sadd.s32 %s94, 1
      %p98 = scmp.eq.s32.totalorder %s18, 1
      %p99 = scmp.ne.s32.totalorder %s94, %s96
      %p100 = scmp.eq.s32.totalorder %s18, 0
      %p101 = por %p99, %p100
      %p102 = scmp.ne.s32.totalorder %s94, %s96
      %p103 = scmp.eq.s32.totalorder %s23, 1
      %p104 = por %p102, %p103
      %p105 = scmp.ne.s32.totalorder %s96, %s97
      %p106 = scmp.eq.s32.totalorder %s23, 0
      %p107 = por %p105, %p106
      %p108 = scmp.ne.s32.totalorder %s96, %s97
      %p109 = scmp.eq.s32.totalorder %s24, 1
      %p110 = por %p108, %p109
      %p112 = scmp.ne.s32.totalorder %s97, %s111
      %p113 = scmp.eq.s32.totalorder %s24, 0
      %p114 = por %p112, %p113
      %s116 = sadd.s32 %s115, 1
      %p119 = scmp.eq.s32.totalorder %s18, 1
      %p120 = scmp.ne.s32.totalorder %s115, %s117
      %p121 = scmp.eq.s32.totalorder %s18, 0
      %p122 = por %p120, %p121
      %p123 = scmp.ne.s32.totalorder %s115, %s117
      %p124 = scmp.eq.s32.totalorder %s23, 1
      %p125 = por %p123, %p124
      %p126 = scmp.ne.s32.totalorder %s117, %s118
      %p127 = scmp.eq.s32.totalorder %s23, 0
      %p128 = por %p126, %p127
      %p129 = scmp.ne.s32.totalorder %s117, %s118
      %p130 = scmp.eq.s32.totalorder %s24, 1
      %p131 = por %p129, %p130
      %p133 = scmp.ne.s32.totalorder %s118, %s132
      %p134 = scmp.eq.s32.totalorder %s24, 0
      %p135 = por %p133, %p134
      %s136 = ssub.s32 %s18, %s25
      %p137 = scmp.eq.s32.totalorder %s136, 0
      %s139 = sadd.s32 %s138, 1
      %s140 = scalar_select %p137, %s138, %s139
      %p143 = pneg %p137
      %p144 = scmp.eq.s32.totalorder %s18, 1
      %p145 = por %p143, %p144
      %p146 = scmp.ne.s32.totalorder %s138, %s141
      %p147 = scmp.eq.s32.totalorder %s18, 0
      %p148 = por %p146, %p147
      %p149 = scmp.ne.s32.totalorder %s138, %s141
      %p150 = scmp.eq.s32.totalorder %s23, 1
      %p151 = por %p149, %p150
      %p152 = scmp.ne.s32.totalorder %s141, %s142
      %p153 = scmp.eq.s32.totalorder %s23, 0
      %p154 = por %p152, %p153
      %p155 = scmp.ne.s32.totalorder %s141, %s142
      %p156 = scmp.eq.s32.totalorder %s24, 1
      %p157 = por %p155, %p156
      %p159 = scmp.ne.s32.totalorder %s142, %s158
      %p160 = scmp.eq.s32.totalorder %s24, 0
      %p161 = por %p159, %p160
      %p162 = scmp.le.s32.totalorder 1, %s18
      %p163 = scmp.lt.s32.totalorder %s18, 3
      %p164 = pnand %p162, %p163
      %p165 = pneg %p164
      // Predicated region
      $region9: #{residual_block.1} parent=5 // pred_check
        _
      $region10: #{residual_block.1} parent=5 // pred_check_branch
        %167 = sbr.rel (%p164) target = $region12
      $region11: #{residual_block.1} parent=5 // pred_region
        %s168 = ssub.s32 %s18, 1
        // Predicated region
        $region13: #{residual_block.1} parent=11 // pred_check
          %p169 = pneg %p65
        $region14: #{residual_block.1} parent=11 // pred_check_branch
          %171 = sbr.rel (%p169) target = $region16
        $region15: #{residual_block.1} parent=11 // pred_region
          %s173 = ssub.s32 512, 512
          %174 = vsyncadd [#allocation6], %s173
          %s175 = sshll.u32 [#allocation5], 4
          %s176 = int_to_ptr.vmem [resolvable:$true] %s175
          %181 = dma.hbm_to_vmem [thread:$0]  %s1, 512, %s176, [#allocation6], 128, 128, 8
        $region16: #{residual_block.1} parent=11 // pred_fallthru
          _
        // Predicated region
        $region17: #{residual_block.1} parent=11 // pred_check
          %p182 = pneg %p86
        $region18: #{residual_block.1} parent=11 // pred_check_branch
          %184 = sbr.rel (%p182) target = $region20
        $region19: #{residual_block.1} parent=11 // pred_region
          _
        $region20: #{residual_block.1} parent=11 // pred_fallthru
          _
        // Predicated region
        $region21: #{residual_block.1} parent=11 // pred_check
          %p185 = pneg %p107
        $region22: #{residual_block.1} parent=11 // pred_check_branch
          %187 = sbr.rel (%p185) target = $region24
        $region23: #{residual_block.1} parent=11 // pred_region
          %s189 = ssub.s32 512, 512
          %190 = vsyncadd [#allocation6], %s189
          %s191 = sshll.u32 [#allocation7], 4
          %s192 = int_to_ptr.vmem [resolvable:$true] %s191
          %197 = dma.hbm_to_vmem [thread:$0]  %s3, 512, %s192, [#allocation6], 128, 128, 8
        $region24: #{residual_block.1} parent=11 // pred_fallthru
          _
        // Predicated region
        $region25: #{residual_block.1} parent=11 // pred_check
          %p198 = pneg %p128
        $region26: #{residual_block.1} parent=11 // pred_check_branch
          %200 = sbr.rel (%p198) target = $region28
        $region27: #{residual_block.1} parent=11 // pred_region
          _
        $region28: #{residual_block.1} parent=11 // pred_fallthru
          _
      $region12: #{residual_block.1} parent=5 // pred_fallthru
        _
      %p201 = scmp.lt.s32.totalorder %s18, 2
      // Predicated region
      $region29: #{residual_block.1} parent=5 // pred_check
        %p202 = pneg %p201
      $region30: #{residual_block.1} parent=5 // pred_check_branch
        %204 = sbr.rel (%p202) target = $region32
      $region31: #{residual_block.1} parent=5 // pred_region
        // Predicated region
        $region33: #{residual_block.1} parent=31 // pred_check
          %p205 = pneg %p38
        $region34: #{residual_block.1} parent=31 // pred_check_branch
          %207 = sbr.rel (%p205) target = $region36
        $region35: #{residual_block.1} parent=31 // pred_region
          %s208 = sand.u32 %s28, 1
          %s209 = scalar_lea.sflag [#allocation3], %s208
          %s210 = sand.u32 %s28, 1
          %s211 = smul.addr %s210, 8
          %s212 = scalar_lea.vmem [#allocation2], %s211
          %s214 = ssub.s32 128, 128
          %215 = vsyncadd %s209, %s214
          %s216 = smul.addr %s18, 128
          %s217 = scalar_lea.hbm %s0, %s216
          %s219 = sshll.u32 %s212, 4
          %s220 = int_to_ptr.vmem [resolvable:$true] %s219
          %222 = dma.hbm_to_vmem [thread:$0]  %s217, 128, %s220, %s209
        $region36: #{residual_block.1} parent=31 // pred_fallthru
          _
      $region32: #{residual_block.1} parent=5 // pred_fallthru
        _
      %p223 = scmp.le.s32.totalorder 1, %s18
      %p224 = scmp.lt.s32.totalorder %s18, 3
      %p225 = pnand %p223, %p224
      %p226 = pneg %p225
      // Predicated region
      $region37: #{residual_block.1} parent=5 // pred_check
        _
      $region38: #{residual_block.1} parent=5 // pred_check_branch
        %228 = sbr.rel (%p225) target = $region40
      $region39: #{residual_block.1} parent=5 // pred_region
        %s229 = ssub.s32 %s18, 1
        %s230 = sand.u32 %s31, 1
        %s231 = scalar_lea.sflag [#allocation3], %s230
        %s232 = sand.u32 %s31, 1
        %s233 = smul.addr %s232, 8
        %s234 = scalar_lea.vmem [#allocation2], %s233
        // Predicated region
        $region41: #{residual_block.1} parent=39 // pred_check
          %p235 = pneg %p44
        $region42: #{residual_block.1} parent=39 // pred_check_branch
          %237 = sbr.rel (%p235) target = $region44
        $region43: #{residual_block.1} parent=39 // pred_region
          %238 = dma.done %s231, 128
        $region44: #{residual_block.1} parent=39 // pred_fallthru
          _
        // Predicated region
        $region45: #{residual_block.1} parent=39 // pred_check
          %p239 = pneg %p65
        $region46: #{residual_block.1} parent=39 // pred_check_branch
          %241 = sbr.rel (%p239) target = $region48
        $region47: #{residual_block.1} parent=39 // pred_region
          %242 = dma.done [#allocation6], 512
        $region48: #{residual_block.1} parent=39 // pred_fallthru
          _
        // Predicated region
        $region49: #{residual_block.1} parent=39 // pred_check
          %p243 = pneg %p107
        $region50: #{residual_block.1} parent=39 // pred_check_branch
          %245 = sbr.rel (%p243) target = $region52
        $region51: #{residual_block.1} parent=39 // pred_region
          %246 = dma.done [#allocation6], 512
        $region52: #{residual_block.1} parent=39 // pred_fallthru
          _
        %s247 = sand.u32 %s31, 1
        %s248 = scalar_lea.sflag [#allocation3], %s247
        %s249 = sand.u32 %s31, 1
        %s250 = smul.addr %s249, 8
        %s251 = scalar_lea.vmem [#allocation2], %s250
        %p252 = pneg %p44
        %p253 = pneg %p41
        %p254 = pneg %p65
        %p255 = pneg %p62
        %p256 = pneg %p86
        %p257 = pneg %p83
        %p258 = pneg %p107
        %p259 = pneg %p104
        %p260 = pneg %p128
        %p261 = pneg %p125
        %p262 = pneg %p154
        %p263 = pneg %p151
        %s264 = sand.u32 %s141, 1
        %s265 = scalar_lea.sflag [#allocation4], %s264
        %s266 = sand.u32 %s141, 1
        %s267 = smul.addr %s266, 8
        %s268 = scalar_lea.vmem [#allocation8], %s267
        %v269 = vld [vmem:[%s234] sm:$0xff]
        %v270 = vld [vmem:[#allocation5] sm:$0xff]
        %v271 = vld [vmem:[#allocation5 + $0x8] sm:$0xff]
        %v272 = vld [vmem:[#allocation5 + $0x10] sm:$0xff]
        %v273 = vld [vmem:[#allocation5 + $0x18] sm:$0xff]
        %v274 = vld [vmem:[%s2] sm:$0x1]
        %v276 = vlaneseq
        %v277 = vshrl.u32 %v276, 7
        %v278 = vsub.s32 0, %v277
        %v279 = vrot.slane %v274, %v278
        %vm281 = vcmask 261120
        %v283 = vsel %vm281, %v269, 0
        %v286 = vsel %vm281, %v270, 0
        %v289 = vsel %vm281, %v271, 0
        %v292 = vsel %vm281, %v272, 0
        %v295 = vsel %vm281, %v273, 0
        %297 = vmatprep.subr.mxu0 0.0
        %298 = vmatpush1.xpose.msra.mxu0 %v286
        %299 = vmatprep.subr.mxu0 0.0
        %300 = vmatpush1.xpose.msra.mxu0 %v289
        %301 = vmatprep.subr.mxu0 0.0
        %302 = vmatpush1.xpose.msra.mxu0 %v292
        %303 = vmatprep.subr.mxu0 0.0
        %304 = vmatpush1.xpose.msra.mxu0 %v295
        %305 = vmatprep.subr.mxu0 0.0
        %306 = vmatpush1.xpose.msra.mxu0 0.0
        %307 = vmatprep.subr.mxu0 0.0
        %308 = vmatpush1.xpose.msra.mxu0 0.0
        %309 = vmatprep.subr.mxu0 0.0
        %310 = vmatpush1.xpose.msra.mxu0 0.0
        %311 = vmatprep.subr.mxu0 0.0
        %312 = vmatpush1.xpose.msra.mxu0 0.0
        %313 = vmatprep.subr.mxu0 0.0
        %314 = vmatpush1.xpose.msra.mxu0 0.0
        %315 = vmatprep.subr.mxu0 0.0
        %316 = vmatpush1.xpose.msra.mxu0 0.0
        %317 = vmatprep.subr.mxu0 0.0
        %318 = vmatpush1.xpose.msra.mxu0 0.0
        %319 = vmatprep.subr.mxu0 0.0
        %320 = vmatpush1.xpose.msra.mxu0 0.0
        %321 = vmatprep.subr.mxu0 0.0
        %322 = vmatpush1.xpose.msra.mxu0 0.0
        %323 = vmatprep.subr.mxu0 0.0
        %324 = vmatpush1.xpose.msra.mxu0 0.0
        %325 = vmatprep.subr.mxu0 0.0
        %326 = vmatpush1.xpose.msra.mxu0 0.0
        %327 = vmatprep.subr.mxu0 0.0
        %328 = vmatpush1.xpose.msra.mxu0 0.0
        %329 = vmatprep.subr.mxu0 0.0
        %330 = vmatpush1.xpose.msra.mxu0 0.0
        %331 = vmatprep.subr.mxu0 0.0
        %332 = vmatpush1.xpose.msra.mxu0 0.0
        %333 = vmatprep.subr.mxu0 0.0
        %334 = vmatpush1.xpose.msra.mxu0 0.0
        %335 = vmatprep.subr.mxu0 0.0
        %336 = vmatpush1.xpose.msra.mxu0 0.0
        %337 = vmatprep.subr.mxu0 0.0
        %338 = vmatpush1.xpose.msra.mxu0 0.0
        %339 = vmatprep.subr.mxu0 0.0
        %340 = vmatpush1.xpose.msra.mxu0 0.0
        %341 = vmatprep.subr.mxu0 0.0
        %342 = vmatpush1.xpose.msra.mxu0 0.0
        %343 = vmatprep.subr.mxu0 0.0
        %344 = vmatpush1.xpose.msra.mxu0 0.0
        %345 = vmatprep.subr.mxu0 0.0
        %346 = vmatpush1.xpose.msra.mxu0 0.0
        %347 = vmatprep.subr.mxu0 0.0
        %348 = vmatpush1.xpose.msra.mxu0 0.0
        %349 = vmatprep.subr.mxu0 0.0
        %350 = vmatpush1.xpose.msra.mxu0 0.0
        %351 = vmatprep.subr.mxu0 0.0
        %352 = vmatpush1.xpose.msra.mxu0 0.0
        %353 = vmatprep.subr.mxu0 0.0
        %354 = vmatpush1.xpose.msra.mxu0 0.0
        %355 = vmatprep.subr.mxu0 0.0
        %356 = vmatpush1.xpose.msra.mxu0 0.0
        %357 = vmatprep.subr.mxu0 0.0
        %358 = vmatpush1.xpose.msra.mxu0 0.0
        %359 = vmatprep.subr.mxu0 0.0
        %360 = vmatpush1.xpose.msra.mxu0 0.0
        %361 = vmatprep.mubr.f32.mxu0 0.0
        %362 = vmatmul.mubr.f32.gmra.mrb[0].mxu0 %v283
        %v363 = vpop.f32.mrb[0].mxu0
        %v364 = vadd.f32 %v279, %v363
        %v365 = vpop.f32.mrb[0].mxu0
        %366 = vdwg.mxu0
        %v367 = vtanh.pop %v364
        %v368 = vld [vmem:[#allocation7] sm:$0xff]
        %v369 = vld [vmem:[#allocation7 + $0x8] sm:$0xff]
        %v370 = vld [vmem:[#allocation7 + $0x10] sm:$0xff]
        %v371 = vld [vmem:[#allocation7 + $0x18] sm:$0xff]
        %v372 = vld [vmem:[%s4] sm:$0x1]
        %v374 = vlaneseq
        %v375 = vshrl.u32 %v374, 7
        %v376 = vsub.s32 0, %v375
        %v377 = vrot.slane %v372, %v376
        %v380 = vsel %vm281, %v367, 0
        %v383 = vsel %vm281, %v368, 0
        %v386 = vsel %vm281, %v369, 0
        %v389 = vsel %vm281, %v370, 0
        %v392 = vsel %vm281, %v371, 0
        %394 = vmatprep.subr.mxu0 0.0
        %395 = vmatpush1.xpose.msra.mxu0 %v383
        %396 = vmatprep.subr.mxu0 0.0
        %397 = vmatpush1.xpose.msra.mxu0 %v386
        %398 = vmatprep.subr.mxu0 0.0
        %399 = vmatpush1.xpose.msra.mxu0 %v389
        %400 = vmatprep.subr.mxu0 0.0
        %401 = vmatpush1.xpose.msra.mxu0 %v392
        %402 = vmatprep.subr.mxu0 0.0
        %403 = vmatpush1.xpose.msra.mxu0 0.0
        %404 = vmatprep.subr.mxu0 0.0
        %405 = vmatpush1.xpose.msra.mxu0 0.0
        %406 = vmatprep.subr.mxu0 0.0
        %407 = vmatpush1.xpose.msra.mxu0 0.0
        %408 = vmatprep.subr.mxu0 0.0
        %409 = vmatpush1.xpose.msra.mxu0 0.0
        %410 = vmatprep.subr.mxu0 0.0
        %411 = vmatpush1.xpose.msra.mxu0 0.0
        %412 = vmatprep.subr.mxu0 0.0
        %413 = vmatpush1.xpose.msra.mxu0 0.0
        %414 = vmatprep.subr.mxu0 0.0
        %415 = vmatpush1.xpose.msra.mxu0 0.0
        %416 = vmatprep.subr.mxu0 0.0
        %417 = vmatpush1.xpose.msra.mxu0 0.0
        %418 = vmatprep.subr.mxu0 0.0
        %419 = vmatpush1.xpose.msra.mxu0 0.0
        %420 = vmatprep.subr.mxu0 0.0
        %421 = vmatpush1.xpose.msra.mxu0 0.0
        %422 = vmatprep.subr.mxu0 0.0
        %423 = vmatpush1.xpose.msra.mxu0 0.0
        %424 = vmatprep.subr.mxu0 0.0
        %425 = vmatpush1.xpose.msra.mxu0 0.0
        %426 = vmatprep.subr.mxu0 0.0
        %427 = vmatpush1.xpose.msra.mxu0 0.0
        %428 = vmatprep.subr.mxu0 0.0
        %429 = vmatpush1.xpose.msra.mxu0 0.0
        %430 = vmatprep.subr.mxu0 0.0
        %431 = vmatpush1.xpose.msra.mxu0 0.0
        %432 = vmatprep.subr.mxu0 0.0
        %433 = vmatpush1.xpose.msra.mxu0 0.0
        %434 = vmatprep.subr.mxu0 0.0
        %435 = vmatpush1.xpose.msra.mxu0 0.0
        %436 = vmatprep.subr.mxu0 0.0
        %437 = vmatpush1.xpose.msra.mxu0 0.0
        %438 = vmatprep.subr.mxu0 0.0
        %439 = vmatpush1.xpose.msra.mxu0 0.0
        %440 = vmatprep.subr.mxu0 0.0
        %441 = vmatpush1.xpose.msra.mxu0 0.0
        %442 = vmatprep.subr.mxu0 0.0
        %443 = vmatpush1.xpose.msra.mxu0 0.0
        %444 = vmatprep.subr.mxu0 0.0
        %445 = vmatpush1.xpose.msra.mxu0 0.0
        %446 = vmatprep.subr.mxu0 0.0
        %447 = vmatpush1.xpose.msra.mxu0 0.0
        %448 = vmatprep.subr.mxu0 0.0
        %449 = vmatpush1.xpose.msra.mxu0 0.0
        %450 = vmatprep.subr.mxu0 0.0
        %451 = vmatpush1.xpose.msra.mxu0 0.0
        %452 = vmatprep.subr.mxu0 0.0
        %453 = vmatpush1.xpose.msra.mxu0 0.0
        %454 = vmatprep.subr.mxu0 0.0
        %455 = vmatpush1.xpose.msra.mxu0 0.0
        %456 = vmatprep.subr.mxu0 0.0
        %457 = vmatpush1.xpose.msra.mxu0 0.0
        %458 = vmatprep.mubr.f32.mxu0 0.0
        %459 = vmatmul.mubr.f32.gmra.mrb[0].mxu0 %v380
        %v460 = vpop.f32.mrb[0].mxu0
        %v461 = vadd.f32 %v377, %v460
        %v462 = vpop.f32.mrb[0].mxu0
        %463 = vdwg.mxu0
        %v464 = vadd.f32 %v461, %v269
        %v465 = vtanh.pop %v464
        %466 = vst.msk [vmem:[%s268] sm:$0xff] %vm281, %v465
        %s467 = sand.u32 %s141, 1
        %s468 = scalar_lea.sflag [#allocation4], %s467
        %s469 = sand.u32 %s141, 1
        %s470 = smul.addr %s469, 8
        %s471 = scalar_lea.vmem [#allocation8], %s470
        // Predicated region
        $region53: #{residual_block.1} parent=39 // pred_check
          %p472 = pneg %p151
        $region54: #{residual_block.1} parent=39 // pred_check_branch
          %474 = sbr.rel (%p472) target = $region56
        $region55: #{residual_block.1} parent=39 // pred_region
          %s476 = ssub.s32 128, 128
          %477 = vsyncadd %s468, %s476
          %s478 = smul.addr %s23, 128
          %s479 = scalar_lea.hbm %s5, %s478
          %s481 = sshll.u32 %s471, 4
          %s482 = int_to_ptr.vmem [resolvable:$true] %s481
          %484 = dma.vmem_to_hbm [thread:$0]  %s482, 128, %s479, %s468
        $region56: #{residual_block.1} parent=39 // pred_fallthru
          _
      $region40: #{residual_block.1} parent=5 // pred_fallthru
        _
      %p485 = scmp.le.s32.totalorder 2, %s18
      // Predicated region
      $region57: #{residual_block.1} parent=5 // pred_check
        %p486 = pneg %p485
      $region58: #{residual_block.1} parent=5 // pred_check_branch
        %488 = sbr.rel (%p486) target = $region60
      $region59: #{residual_block.1} parent=5 // pred_region
        %s489 = ssub.s32 %s18, 2
        // Predicated region
        $region61: #{residual_block.1} parent=59 // pred_check
          %p490 = pneg %p157
        $region62: #{residual_block.1} parent=59 // pred_check_branch
          %492 = sbr.rel (%p490) target = $region64
        $region63: #{residual_block.1} parent=59 // pred_region
          %s493 = sand.u32 %s142, 1
          %s494 = scalar_lea.sflag [#allocation4], %s493
          %s495 = sand.u32 %s142, 1
          %s496 = smul.addr %s495, 8
          %s497 = scalar_lea.vmem [#allocation8], %s496
          %498 = dma.done %s494, 128
        $region64: #{residual_block.1} parent=59 // pred_fallthru
          _
      $region60: #{residual_block.1} parent=5 // pred_fallthru
        _
    $region6: #{residual_block.1} parent=1 // loop_footer
      %s22 = sadd.s32 1, %s18
    $region7: #{residual_block.1} parent=1 // loop_footer_branch
      %17 = sbr.rel target = $region3
    $region8: #{residual_block.1} parent=1 // loop_exit
      _
    %499 = vsyncpa [#allocation3], 1
    %s500 = scalar_lea.sflag [#allocation3], 1
    %501 = vsyncpa %s500, 1
    %502 = vsyncpa [#allocation6], 1
    %503 = vsyncpa [#allocation4], 1
    %s504 = scalar_lea.sflag [#allocation4], 1
    %505 = vsyncpa %s504, 1

</llo_original>
